<compile_context>
chip_gen: v7x
topology: tpu7x:2x2x1
jax: 0.10.0
libtpu: 0.0.40
codegen_flags: <defaults>
</compile_context>

<pallas_src>
import functools

import jax
import jax.numpy as jnp
import numpy as np
from jax.experimental import pallas as pl
from jax.experimental.pallas import tpu as pltpu


# ----------------------------------------------------------------------------
# Hardware query (trace-time; falls back to the most conservative config).
# ----------------------------------------------------------------------------
def _detect_vmem_capacity():
    try:
        info = pltpu.get_tpu_info()
        for attr in ("vmem_capacity_bytes", "vmem_size_bytes", "vmem_bytes"):
            cap = getattr(info, attr, None)
            if cap:
                return int(cap)
    except Exception:
        pass
    return 64 << 20  # conservative default = v7x per-TC VMEM


_VMEM_CAPACITY = _detect_vmem_capacity()


# ----------------------------------------------------------------------------
# Kernel bodies.
# ----------------------------------------------------------------------------
def _sdpa_body(s, q_ref, k_ref, v_ref, out_ref, attn_ref):
    # q_ref/k_ref blocks: (2, tm, lane) -> [0] = real half, [1] = imag half
    # v_ref block:        (1, tm, lane) -> only the real half is ever used
    qr = q_ref[0]
    qi = q_ref[1]
    kr = k_ref[0]
    ki = k_ref[1]
    vr = v_ref[0]

    attn_re = s * (qr * kr - qi * ki)
    attn_im = s * (qr * ki - qi * kr)   # reference uses "-" here (matches spec)

    if attn_ref is not None:
        attn_ref[0] = attn_re
        attn_ref[1] = attn_im
    # v_im == v_re in the reference, so factor out vr (saves 2 VPU muls/vreg).
    out_ref[0] = (attn_re - attn_im) * vr
    out_ref[1] = (attn_re + attn_im) * vr


def _make_kernel(scale_const, lsa, emit_attn):
    if lsa:
        if emit_attn:
            def kernel(scale_ref, q_ref, k_ref, v_ref, out_ref, attn_ref):
                _sdpa_body(scale_ref[0, 0], q_ref, k_ref, v_ref, out_ref, attn_ref)
        else:
            def kernel(scale_ref, q_ref, k_ref, v_ref, out_ref):
                _sdpa_body(scale_ref[0, 0], q_ref, k_ref, v_ref, out_ref, None)
    else:
        if emit_attn:
            def kernel(q_ref, k_ref, v_ref, out_ref, attn_ref):
                _sdpa_body(scale_const, q_ref, k_ref, v_ref, out_ref, attn_ref)
        else:
            def kernel(q_ref, k_ref, v_ref, out_ref):
                _sdpa_body(scale_const, q_ref, k_ref, v_ref, out_ref, None)
    return kernel


# ----------------------------------------------------------------------------
# Layout / tiling decisions (all static, runs at trace time under jit).
# ----------------------------------------------------------------------------
def _choose_layout(n_elems, natural_lane, itemsize, vmem_capacity):
    """Pick (lane, rows, tm, grid) for one re/im half flattened to 2-D."""
    lane = natural_lane                      # fallback: full (narrow) last dim
    for cand in (1024, 512, 256, 128):
        if n_elems % cand == 0:
            lane = cand
            break
    rows = n_elems // lane
    sub = max(8, 32 // itemsize)             # dtype-aware sublane quantum

    if rows <= sub:
        # Tiny problem: single full-extent block (block dims == array dims).
        return lane, rows, rows, 1

    # Generation-aware slab size: ~cap/32 per slab keeps the 9-slab,
    # double-buffered footprint at ~0.56 * VMEM (2 MiB on v7x, 4 MiB on v6e).
    target_block_bytes = min(4 << 20, max(1 << 20, vmem_capacity // 32))
    target_rows = max(sub, (target_block_bytes // (lane * itemsize)) // sub * sub)

    # Guarantee >= 2 grid steps when possible so both v7x TensorCores get work.
    half_rows = max(sub, (((rows + 1) // 2) // sub) * sub)
    tm = min(target_rows, half_rows)
    grid = pl.cdiv(rows, tm)                 # ragged tail -> masked partial block
    return lane, rows, tm, grid


def _vmem_limit_bytes(block_bytes, n_slabs, vmem_capacity):
    needed = 2 * n_slabs * block_bytes + (4 << 20)      # double buffer + headroom
    limit = max(32 << 20, needed)
    return int(min(limit, max(32 << 20, (vmem_capacity * 3) // 4)))


# ----------------------------------------------------------------------------
# pallas_call wrapper.
# ----------------------------------------------------------------------------
def _run_pallas(scale2d, q2, k2, v2, *, lane, rows, tm, grid, itemsize,
                lsa, scale_const, emit_attn):
    kernel = _make_kernel(scale_const, lsa, emit_attn)

    qk_spec = pl.BlockSpec((2, tm, lane), lambda i: (0, i, 0))
    v_spec = pl.BlockSpec((1, tm, lane), lambda i: (0, i, 0))   # real half only
    out_spec = pl.BlockSpec((2, tm, lane), lambda i: (0, i, 0))
    out_sds = jax.ShapeDtypeStruct((2, rows, lane), q2.dtype)

    in_specs = [qk_spec, qk_spec, v_spec]
    args = [q2, k2, v2]
    if lsa:
        in_specs = [pl.BlockSpec(memory_space=pltpu.MemorySpace.SMEM)] + in_specs
        args = [scale2d] + args

    out_specs = [out_spec, out_spec] if emit_attn else [out_spec]
    out_shape = [out_sds, out_sds] if emit_attn else [out_sds]

    n_slabs = 5 + (4 if emit_attn else 2)   # q(2)+k(2)+v(1) + out(2)[+attn(2)]
    vmem_limit = _vmem_limit_bytes(tm * lane * itemsize, n_slabs, _VMEM_CAPACITY)

    return pl.pallas_call(
        kernel,
        grid=(grid,),
        in_specs=in_specs,
        out_specs=out_specs,
        out_shape=out_shape,
        compiler_params=pltpu.CompilerParams(
            dimension_semantics=("parallel",),
            vmem_limit_bytes=vmem_limit,
        ),
    )(*args)


# ----------------------------------------------------------------------------
# Module wrapper.
# ----------------------------------------------------------------------------
class ScaledDotProductAttentionPallas:
    """JAX/Pallas port of `_ScaledDotProductAttention` (forward only).

    Set return_attn=False to use the lighter kernel variant (no attn_scores
    write, ~22% less HBM traffic) when the caller ignores attn_scores.
    """

    def __init__(self, d_model, n_heads, attn_dropout=0.0,
                 res_attention=False, lsa=False, return_attn=True):
        head_dim = d_model // n_heads
        self._scale_const = float(head_dim ** (-0.5))
        self.scale = jnp.asarray(self._scale_const, dtype=jnp.float32)
        self.res_attention = res_attention
        self.lsa = lsa
        self.return_attn = bool(return_attn) or res_attention
        # TODO(synk): attn_dropout / prev / key_padding_mask / attn_mask are
        # unused by the reference forward math (pure elementwise) -> ignored.
        self._fwd = jax.jit(self._build_forward())

    def _build_forward(self):
        lsa = self.lsa
        scale_const = self._scale_const
        emit_attn = self.return_attn

        def fwd(q, k, v, scale):
            b2 = q.shape[0]
            assert b2 % 2 == 0, "leading axis must stack real/imag halves"
            half = b2 // 2
            n = half * int(np.prod(q.shape[1:]))
            itemsize = jnp.dtype(q.dtype).itemsize
            lane, rows, tm, grid = _choose_layout(
                n, natural_lane=q.shape[-1], itemsize=itemsize,
                vmem_capacity=_VMEM_CAPACITY)

            # Contiguous re/im stacking: (2*half, ...) -> (2, rows, lane).
            # Pure reshape (metadata-only under jit); [0] == x[:half].
            q2 = q.reshape(2, rows, lane)
            k2 = k.reshape(2, rows, lane)
            v2 = v.reshape(2, rows, lane)
            scale2d = scale.astype(q.dtype).reshape(1, 1)

            results = _run_pallas(scale2d, q2, k2, v2,
                                  lane=lane, rows=rows, tm=tm, grid=grid,
                                  itemsize=itemsize, lsa=lsa,
                                  scale_const=scale_const, emit_attn=emit_attn)
            if emit_attn:
                out2, attn2 = results
                # (2, rows, lane) reshaped back is exactly the concatenated
                # [re ; im] layout of the reference.
                return out2.reshape(q.shape), attn2.reshape(q.shape)
            (out2,) = results
            return out2.reshape(q.shape), None

        return fwd

    def __call__(self, q, k, v, prev=None, key_padding_mask=None,
                 attn_mask=None):
        output, attn_scores = self._fwd(q, k, v, self.scale)
        if self.res_attention:
            return output, attn_scores, attn_scores
        return output, attn_scores


# ----------------------------------------------------------------------------
# Pure-JAX reference (mirrors the PyTorch module exactly).
# ----------------------------------------------------------------------------
def _reference(scale, q, k, v):
    half = q.shape[0] // 2
    q_re, q_im = q[:half], q[half:]
    k_re, k_im = k[:half], k[half:]
    v_re, v_im = v[:half], v[:half]
    attn_re = scale * (q_re * k_re - q_im * k_im)
    attn_im = scale * (q_re * k_im - q_im * k_re)
    attn = jnp.concatenate([attn_re, attn_im], axis=0)
    out_re = attn_re * v_re - attn_im * v_im
    out_im = attn_re * v_im + attn_im * v_re
    out = jnp.concatenate([out_re, out_im], axis=0)
    return out, attn


if __name__ == "__main__":
    d_model, n_heads = 64, 4          # head_dim = 16
    B2, H, S, Dh = 4, n_heads, 32, d_model // n_heads

    key = jax.random.PRNGKey(0)
    kq, kk, kv = jax.random.split(key, 3)
    q = jax.random.normal(kq, (B2, H, S, Dh), dtype=jnp.float32)
    k = jax.random.normal(kk, (B2, H, S, Dh), dtype=jnp.float32)
    v = jax.random.normal(kv, (B2, H, S, Dh), dtype=jnp.float32)

    # 1) Default path: baked-in scale, attn emitted (full module semantics).
    mod = ScaledDotProductAttentionPallas(d_model, n_heads)
    output, attn_scores = mod(q, k, v)
    jax.block_until_ready((output, attn_scores))
    ref_out, ref_attn = _reference(mod.scale, q, k, v)
    np.testing.assert_allclose(np.asarray(output), np.asarray(ref_out),
                               rtol=1e-6, atol=1e-6)
    np.testing.assert_allclose(np.asarray(attn_scores), np.asarray(ref_attn),
                               rtol=1e-6, atol=1e-6)

    # 2) Attn-skipping variant (caller that ignores attn_scores): ~22% less HBM.
    mod_noattn = ScaledDotProductAttentionPallas(d_model, n_heads,
                                                 return_attn=False)
    out_na, attn_na = mod_noattn(q, k, v)
    jax.block_until_ready(out_na)
    assert attn_na is None
    np.testing.assert_allclose(np.asarray(out_na), np.asarray(ref_out),
                               rtol=1e-6, atol=1e-6)

    # 3) Learnable-scale (lsa) path: scale passed through SMEM.
    mod_lsa = ScaledDotProductAttentionPallas(d_model, n_heads, lsa=True)
    out_lsa, attn_lsa = mod_lsa(q, k, v)
    jax.block_until_ready((out_lsa, attn_lsa))
    np.testing.assert_allclose(np.asarray(out_lsa), np.asarray(ref_out),
                               rtol=1e-6, atol=1e-6)
    np.testing.assert_allclose(np.asarray(attn_lsa), np.asarray(ref_attn),
                               rtol=1e-6, atol=1e-6)

    # 4) Medium shape exercising >=2 grid steps and a masked partial tail block.
    B2m, Hm, Sm, Dhm = 6, 4, 40, 32
    qm = jax.random.normal(kq, (B2m, Hm, Sm, Dhm), dtype=jnp.float32)
    km = jax.random.normal(kk, (B2m, Hm, Sm, Dhm), dtype=jnp.float32)
    vm = jax.random.normal(kv, (B2m, Hm, Sm, Dhm), dtype=jnp.float32)
    outm, attnm = mod(qm, km, vm)
    jax.block_until_ready((outm, attnm))
    ref_outm, ref_attnm = _reference(mod.scale, qm, km, vm)
    np.testing.assert_allclose(np.asarray(outm), np.asarray(ref_outm),
                               rtol=1e-6, atol=1e-6)
    np.testing.assert_allclose(np.asarray(attnm), np.asarray(ref_attnm),
                               rtol=1e-6, atol=1e-6)

    print("KERNEL_OK")
</pallas_src>

<mosaic_0001>
module attributes {stable_mosaic.version = 11 : i64} {
  func.func @kernel(%arg0: i32, %arg1: memref<2x4x1024xf32, #tpu.memory_space<vmem>>, %arg2: memref<2x4x1024xf32, #tpu.memory_space<vmem>>, %arg3: memref<1x4x1024xf32, #tpu.memory_space<vmem>>, %arg4: memref<2x4x1024xf32, #tpu.memory_space<vmem>>, %arg5: memref<2x4x1024xf32, #tpu.memory_space<vmem>>) attributes {dimension_semantics = [#tpu.dimension_semantics<parallel>], iteration_bounds = array<i64: 1>, scalar_prefetch = 0 : i64, scratch_operands = 0 : i64, tpu.core_type = #tpu.core_type<tc>, window_params = [{transform_indices = @transform_0, window_bounds = array<i64: 2, 4, 1024>}, {transform_indices = @transform_1, window_bounds = array<i64: 2, 4, 1024>}, {transform_indices = @transform_2, window_bounds = array<i64: 1, 4, 1024>}, {transform_indices = @transform_3, window_bounds = array<i64: 2, 4, 1024>}, {transform_indices = @transform_4, window_bounds = array<i64: 2, 4, 1024>}]} {
    %c0 = arith.constant 0 : index
    %c0_0 = arith.constant 0 : index
    %c0_1 = arith.constant 0 : index
    %0 = vector.load %arg1[%c0, %c0_0, %c0_1] : memref<2x4x1024xf32, #tpu.memory_space<vmem>>, vector<1x4x1024xf32>
    %1 = vector.shape_cast %0 : vector<1x4x1024xf32> to vector<4x1024xf32>
    %c1 = arith.constant 1 : index
    %c0_2 = arith.constant 0 : index
    %c0_3 = arith.constant 0 : index
    %2 = vector.load %arg1[%c1, %c0_2, %c0_3] : memref<2x4x1024xf32, #tpu.memory_space<vmem>>, vector<1x4x1024xf32>
    %3 = vector.shape_cast %2 : vector<1x4x1024xf32> to vector<4x1024xf32>
    %c0_4 = arith.constant 0 : index
    %c0_5 = arith.constant 0 : index
    %c0_6 = arith.constant 0 : index
    %4 = vector.load %arg2[%c0_4, %c0_5, %c0_6] : memref<2x4x1024xf32, #tpu.memory_space<vmem>>, vector<1x4x1024xf32>
    %5 = vector.shape_cast %4 : vector<1x4x1024xf32> to vector<4x1024xf32>
    %c1_7 = arith.constant 1 : index
    %c0_8 = arith.constant 0 : index
    %c0_9 = arith.constant 0 : index
    %6 = vector.load %arg2[%c1_7, %c0_8, %c0_9] : memref<2x4x1024xf32, #tpu.memory_space<vmem>>, vector<1x4x1024xf32>
    %7 = vector.shape_cast %6 : vector<1x4x1024xf32> to vector<4x1024xf32>
    %c0_10 = arith.constant 0 : index
    %c0_11 = arith.constant 0 : index
    %c0_12 = arith.constant 0 : index
    %8 = vector.load %arg3[%c0_10, %c0_11, %c0_12] : memref<1x4x1024xf32, #tpu.memory_space<vmem>>, vector<1x4x1024xf32>
    %9 = vector.shape_cast %8 : vector<1x4x1024xf32> to vector<4x1024xf32>
    %10 = arith.mulf %1, %5 : vector<4x1024xf32>
    %11 = arith.mulf %3, %7 : vector<4x1024xf32>
    %12 = arith.subf %10, %11 : vector<4x1024xf32>
    %cst = arith.constant 2.500000e-01 : f32
    %13 = vector.broadcast %cst : f32 to vector<4x1024xf32>
    %14 = arith.mulf %13, %12 : vector<4x1024xf32>
    %15 = arith.mulf %1, %7 : vector<4x1024xf32>
    %16 = arith.mulf %3, %5 : vector<4x1024xf32>
    %17 = arith.subf %15, %16 : vector<4x1024xf32>
    %cst_13 = arith.constant 2.500000e-01 : f32
    %18 = vector.broadcast %cst_13 : f32 to vector<4x1024xf32>
    %19 = arith.mulf %18, %17 : vector<4x1024xf32>
    %c0_14 = arith.constant 0 : index
    %c0_15 = arith.constant 0 : index
    %c0_16 = arith.constant 0 : index
    %20 = vector.load %arg5[%c0_14, %c0_15, %c0_16] : memref<2x4x1024xf32, #tpu.memory_space<vmem>>, vector<1x4x1024xf32>
    %21 = vector.shape_cast %20 : vector<1x4x1024xf32> to vector<4x1024xf32>
    %22 = vector.shape_cast %14 : vector<4x1024xf32> to vector<1x4x1024xf32>
    tpu.vector_store %arg5[%c0_14, %c0_15, %c0_16], %22 {strides = array<i32>} : memref<2x4x1024xf32, #tpu.memory_space<vmem>>, vector<1x4x1024xf32>,
    %c1_17 = arith.constant 1 : index
    %c0_18 = arith.constant 0 : index
    %c0_19 = arith.constant 0 : index
    %23 = vector.load %arg5[%c1_17, %c0_18, %c0_19] : memref<2x4x1024xf32, #tpu.memory_space<vmem>>, vector<1x4x1024xf32>
    %24 = vector.shape_cast %23 : vector<1x4x1024xf32> to vector<4x1024xf32>
    %25 = vector.shape_cast %19 : vector<4x1024xf32> to vector<1x4x1024xf32>
    tpu.vector_store %arg5[%c1_17, %c0_18, %c0_19], %25 {strides = array<i32>} : memref<2x4x1024xf32, #tpu.memory_space<vmem>>, vector<1x4x1024xf32>,
    %26 = arith.subf %14, %19 : vector<4x1024xf32>
    %27 = arith.mulf %26, %9 : vector<4x1024xf32>
    %c0_20 = arith.constant 0 : index
    %c0_21 = arith.constant 0 : index
    %c0_22 = arith.constant 0 : index
    %28 = vector.load %arg4[%c0_20, %c0_21, %c0_22] : memref<2x4x1024xf32, #tpu.memory_space<vmem>>, vector<1x4x1024xf32>
    %29 = vector.shape_cast %28 : vector<1x4x1024xf32> to vector<4x1024xf32>
    %30 = vector.shape_cast %27 : vector<4x1024xf32> to vector<1x4x1024xf32>
    tpu.vector_store %arg4[%c0_20, %c0_21, %c0_22], %30 {strides = array<i32>} : memref<2x4x1024xf32, #tpu.memory_space<vmem>>, vector<1x4x1024xf32>,
    %31 = arith.addf %14, %19 : vector<4x1024xf32>
    %32 = arith.mulf %31, %9 : vector<4x1024xf32>
    %c1_23 = arith.constant 1 : index
    %c0_24 = arith.constant 0 : index
    %c0_25 = arith.constant 0 : index
    %33 = vector.load %arg4[%c1_23, %c0_24, %c0_25] : memref<2x4x1024xf32, #tpu.memory_space<vmem>>, vector<1x4x1024xf32>
    %34 = vector.shape_cast %33 : vector<1x4x1024xf32> to vector<4x1024xf32>
    %35 = vector.shape_cast %32 : vector<4x1024xf32> to vector<1x4x1024xf32>
    tpu.vector_store %arg4[%c1_23, %c0_24, %c0_25], %35 {strides = array<i32>} : memref<2x4x1024xf32, #tpu.memory_space<vmem>>, vector<1x4x1024xf32>,
    return
  }
  func.func @transform_0(%arg0: i32) -> (i32, i32, i32) {
    %c0_i32 = arith.constant 0 : i32
    %c0_i32_0 = arith.constant 0 : i32
    %c0_i32_1 = arith.constant 0 : i32
    return %c0_i32, %arg0, %c0_i32_0 : i32, i32, i32
  }
  func.func @transform_1(%arg0: i32) -> (i32, i32, i32) {
    %c0_i32 = arith.constant 0 : i32
    %c0_i32_0 = arith.constant 0 : i32
    %c0_i32_1 = arith.constant 0 : i32
    return %c0_i32, %arg0, %c0_i32_0 : i32, i32, i32
  }
  func.func @transform_2(%arg0: i32) -> (i32, i32, i32) {
    %c0_i32 = arith.constant 0 : i32
    %c0_i32_0 = arith.constant 0 : i32
    %c0_i32_1 = arith.constant 0 : i32
    return %c0_i32, %arg0, %c0_i32_0 : i32, i32, i32
  }
  func.func @transform_3(%arg0: i32) -> (i32, i32, i32) {
    %c0_i32 = arith.constant 0 : i32
    %c0_i32_0 = arith.constant 0 : i32
    %c0_i32_1 = arith.constant 0 : i32
    return %c0_i32, %arg0, %c0_i32_0 : i32, i32, i32
  }
  func.func @transform_4(%arg0: i32) -> (i32, i32, i32) {
    %c0_i32 = arith.constant 0 : i32
    %c0_i32_0 = arith.constant 0 : i32
    %c0_i32_1 = arith.constant 0 : i32
    return %c0_i32, %arg0, %c0_i32_0 : i32, i32, i32
  }
}

</mosaic_0001>

<llo_original>
// kernel: fwd.1
$region0: #{fwd.1}
  #allocation0 [shape = 'u32[]', space=smem, size = 0x4, offset = 0x4, fixed_abs, tag = 'smem constant byte address 0x4 - core index']
  #allocation1 [shape = 'u32[144,128]{1,0:T(1,128)}', space=vmem, size = 0x12000, scoped, tag = 'internal scratch']
  %s0 = inlined_call_operand.vmem [shape: f32[2,4,1024], index: 0, kind: input, shape index: {}]
  %s1 = inlined_call_operand.vmem [shape: f32[2,4,1024], index: 1, kind: input, shape index: {}]
  %s2 = inlined_call_operand.vmem [shape: f32[2,4,1024], index: 2, kind: input, shape index: {}]
  %s3 = inlined_call_operand.vmem [shape: f32[2,4,1024], index: 3, kind: output, shape index: {0}]
  %s4 = inlined_call_operand.vmem [shape: f32[2,4,1024], index: 4, kind: output, shape index: {1}]
  %5 = xla_tuple %s3, %s4
  %s6 = sld [smem:[#allocation0]]
  $region30: #{fwd.1} parent=0
    _
  %s8 = ssub.s32 1, %s6
  %s9 = scalar_select 0, %s8, %s6
  // Predicated region
  $region2: #{fwd.1} parent=0 // pred_check
    _
  $region3: #{fwd.1} parent=0 // pred_check_branch
    %11 = sbr.rel (0) target = $region5
  $region4: #{fwd.1} parent=0 // pred_region
    _
  $region5: #{fwd.1} parent=0 // pred_fallthru
    _
  // Predicated region
  $region6: #{fwd.1} parent=0 // pred_check
    _
  $region7: #{fwd.1} parent=0 // pred_check_branch
    %13 = sbr.rel (0) target = $region9
  $region8: #{fwd.1} parent=0 // pred_region
    _
  $region9: #{fwd.1} parent=0 // pred_fallthru
    _
  // Predicated region
  $region10: #{fwd.1} parent=0 // pred_check
    _
  $region11: #{fwd.1} parent=0 // pred_check_branch
    %15 = sbr.rel (0) target = $region13
  $region12: #{fwd.1} parent=0 // pred_region
    _
  $region13: #{fwd.1} parent=0 // pred_fallthru
    _
  %v16 = vld [vmem:[%s0] sm:$0xff]
  %v17 = vld [vmem:[%s0 + $0x8] sm:$0xff]
  %v18 = vld [vmem:[%s0 + $0x10] sm:$0xff]
  %v19 = vld [vmem:[%s0 + $0x18] sm:$0xff]
  %s20 = scalar_lea.vmem %s0, 32
  %v21 = vld [vmem:[%s20] sm:$0xff]
  %v22 = vld [vmem:[%s20 + $0x8] sm:$0xff]
  %v23 = vld [vmem:[%s20 + $0x10] sm:$0xff]
  %v24 = vld [vmem:[%s20 + $0x18] sm:$0xff]
  %v25 = vld [vmem:[%s1] sm:$0xff]
  %v26 = vld [vmem:[%s1 + $0x8] sm:$0xff]
  %v27 = vld [vmem:[%s1 + $0x10] sm:$0xff]
  %v28 = vld [vmem:[%s1 + $0x18] sm:$0xff]
  %s29 = scalar_lea.vmem %s1, 32
  %v30 = vld [vmem:[%s29] sm:$0xff]
  %v31 = vld [vmem:[%s29 + $0x8] sm:$0xff]
  %v32 = vld [vmem:[%s29 + $0x10] sm:$0xff]
  %v33 = vld [vmem:[%s29 + $0x18] sm:$0xff]
  %v34 = vld [vmem:[%s2] sm:$0xff]
  %v35 = vld [vmem:[%s2 + $0x8] sm:$0xff]
  %v36 = vld [vmem:[%s2 + $0x10] sm:$0xff]
  %v37 = vld [vmem:[%s2 + $0x18] sm:$0xff]
  %v38 = vmul.f32 %v16, %v25
  %v39 = vmul.f32 %v17, %v26
  %v40 = vmul.f32 %v18, %v27
  %v41 = vmul.f32 %v19, %v28
  %v42 = vmul.f32 %v21, %v30
  %v43 = vmul.f32 %v22, %v31
  %v44 = vmul.f32 %v23, %v32
  %v45 = vmul.f32 %v24, %v33
  %v46 = vsub.f32 %v38, %v42
  %v47 = vsub.f32 %v39, %v43
  %v48 = vsub.f32 %v40, %v44
  %v49 = vsub.f32 %v41, %v45
  %v50 = vmul.f32 %v46, 0.25
  %v51 = vmul.f32 %v47, 0.25
  %v52 = vmul.f32 %v48, 0.25
  %v53 = vmul.f32 %v49, 0.25
  %v54 = vmul.f32 %v16, %v30
  %v55 = vmul.f32 %v17, %v31
  %v56 = vmul.f32 %v18, %v32
  %v57 = vmul.f32 %v19, %v33
  %v58 = vmul.f32 %v21, %v25
  %v59 = vmul.f32 %v22, %v26
  %v60 = vmul.f32 %v23, %v27
  %v61 = vmul.f32 %v24, %v28
  %v62 = vsub.f32 %v54, %v58
  %v63 = vsub.f32 %v55, %v59
  %v64 = vsub.f32 %v56, %v60
  %v65 = vsub.f32 %v57, %v61
  %v66 = vmul.f32 %v62, 0.25
  %v67 = vmul.f32 %v63, 0.25
  %v68 = vmul.f32 %v64, 0.25
  %v69 = vmul.f32 %v65, 0.25
  %70 = vst [vmem:[%s4] sm:$0xff] %v50
  %71 = vst [vmem:[%s4 + $0x8] sm:$0xff] %v51
  %72 = vst [vmem:[%s4 + $0x10] sm:$0xff] %v52
  %73 = vst [vmem:[%s4 + $0x18] sm:$0xff] %v53
  %s74 = scalar_lea.vmem %s4, 32
  %75 = vst [vmem:[%s74] sm:$0xff] %v66
  %76 = vst [vmem:[%s74 + $0x8] sm:$0xff] %v67
  %77 = vst [vmem:[%s74 + $0x10] sm:$0xff] %v68
  %78 = vst [vmem:[%s74 + $0x18] sm:$0xff] %v69
  %v79 = vsub.f32 %v50, %v66
  %v80 = vsub.f32 %v51, %v67
  %v81 = vsub.f32 %v52, %v68
  %v82 = vsub.f32 %v53, %v69
  %v83 = vmul.f32 %v79, %v34
  %v84 = vmul.f32 %v80, %v35
  %v85 = vmul.f32 %v81, %v36
  %v86 = vmul.f32 %v82, %v37
  %87 = vst [vmem:[%s3] sm:$0xff] %v83
  %88 = vst [vmem:[%s3 + $0x8] sm:$0xff] %v84
  %89 = vst [vmem:[%s3 + $0x10] sm:$0xff] %v85
  %90 = vst [vmem:[%s3 + $0x18] sm:$0xff] %v86
  %v91 = vadd.f32 %v50, %v66
  %v92 = vadd.f32 %v51, %v67
  %v93 = vadd.f32 %v52, %v68
  %v94 = vadd.f32 %v53, %v69
  %v95 = vmul.f32 %v91, %v34
  %v96 = vmul.f32 %v92, %v35
  %v97 = vmul.f32 %v93, %v36
  %v98 = vmul.f32 %v94, %v37
  %s99 = scalar_lea.vmem %s3, 32
  %100 = vst [vmem:[%s99] sm:$0xff] %v95
  %101 = vst [vmem:[%s99 + $0x8] sm:$0xff] %v96
  %102 = vst [vmem:[%s99 + $0x10] sm:$0xff] %v97
  %103 = vst [vmem:[%s99 + $0x18] sm:$0xff] %v98
  // Predicated region
  $region14: #{fwd.1} parent=0 // pred_check
    _
  $region15: #{fwd.1} parent=0 // pred_check_branch
    %105 = sbr.rel (0) target = $region17
  $region16: #{fwd.1} parent=0 // pred_region
    _
  $region17: #{fwd.1} parent=0 // pred_fallthru
    _
  // Predicated region
  $region18: #{fwd.1} parent=0 // pred_check
    _
  $region19: #{fwd.1} parent=0 // pred_check_branch
    %107 = sbr.rel (0) target = $region21
  $region20: #{fwd.1} parent=0 // pred_region
    _
  $region21: #{fwd.1} parent=0 // pred_fallthru
    _
  // Predicated region
  $region22: #{fwd.1} parent=0 // pred_check
    _
  $region23: #{fwd.1} parent=0 // pred_check_branch
    %109 = sbr.rel (0) target = $region25
  $region24: #{fwd.1} parent=0 // pred_region
    _
  $region25: #{fwd.1} parent=0 // pred_fallthru
    _
  // Predicated region
  $region26: #{fwd.1} parent=0 // pred_check
    _
  $region27: #{fwd.1} parent=0 // pred_check_branch
    %111 = sbr.rel (0) target = $region29
  $region28: #{fwd.1} parent=0 // pred_region
    _
  $region29: #{fwd.1} parent=0 // pred_fallthru
    _

</llo_original>
